<compile_context>
chip_gen: v7x
topology: tpu7x:2x2x1
jax: 0.10.0
libtpu: 0.0.40
codegen_flags: <defaults>
</compile_context>

<pallas_src>
import functools

import jax
import jax.numpy as jnp
from jax import lax
from jax.experimental import pallas as pl
from jax.experimental.pallas import tpu as pltpu

HIDDEN = 64
FUSED = 2 * HIDDEN      # 128: [actor hidden | critic hidden]


def _round_up(n, m):
    return ((n + m - 1) // m) * m


def customnet_kernel(x_ref, w1_ref, b1_ref, w2_ref, b2_ref, w3_ref, b3_ref,
                     out_ref, *, n_actions):
    cdt = w1_ref.dtype                      # compute dtype (bf16 fast path or f32)
    x = x_ref[...].astype(cdt)

    # Layer 1: fused actor|critic, (tile_b, S) @ (S, 128), f32 accumulation.
    h = jnp.dot(x, w1_ref[...], preferred_element_type=jnp.float32)
    h = jnp.maximum(h + b1_ref[...], 0.0)

    # Layer 2: block-diagonal (128, 128) -> one native MXU tile for both branches.
    h = jnp.dot(h.astype(cdt), w2_ref[...], preferred_element_type=jnp.float32)
    h = jnp.maximum(h + b2_ref[...], 0.0)

    # Layer 3: actor logits in lanes [0, A), critic value in lane A, zeros elsewhere.
    z = jnp.dot(h.astype(cdt), w3_ref[...], preferred_element_type=jnp.float32)
    z = z + b3_ref[...]

    # Row-invariant lane mask (1, 128); compares/selects broadcast over rows.
    lane = lax.broadcasted_iota(jnp.int32, (1, z.shape[-1]), 1)
    actor_lane = lane < n_actions

    # Numerically-stable softmax restricted to the first n_actions lanes (all f32).
    masked = jnp.where(actor_lane, z, -jnp.inf)
    m = jnp.max(masked, axis=-1, keepdims=True)
    e = jnp.where(actor_lane, jnp.exp(masked - m), 0.0)
    denom = jnp.sum(e, axis=-1, keepdims=True)
    probs = e * pl.reciprocal(denom)        # exact: keeps the 1e-5 sum-to-1 property

    # Packed lanes: [probs (A) | value (1) | zeros]; store only OUT_W lanes to HBM.
    packed = jnp.where(actor_lane, probs, jnp.where(lane == n_actions, z, 0.0))
    out_ref[...] = packed[:, :out_ref.shape[-1]].astype(out_ref.dtype)


def pack_params(p, *, n_actions, compute_dtype=jnp.bfloat16):
    """Fuse per-branch (in,out) weights into wide / block-diagonal matrices."""
    out_pad = _round_up(max(n_actions + 1, FUSED), 128)        # in-kernel lane width

    w1 = jnp.concatenate([p["aw1"], p["cw1"]], axis=1).astype(compute_dtype)   # (S,128)
    b1 = jnp.concatenate([p["ab1"], p["cb1"]], axis=1).astype(jnp.float32)     # (1,128)

    w2 = jnp.zeros((FUSED, FUSED), jnp.float32)
    w2 = w2.at[:HIDDEN, :HIDDEN].set(p["aw2"]).at[HIDDEN:, HIDDEN:].set(p["cw2"])
    w2 = w2.astype(compute_dtype)                                              # (128,128)
    b2 = jnp.concatenate([p["ab2"], p["cb2"]], axis=1).astype(jnp.float32)     # (1,128)

    w3 = jnp.zeros((FUSED, out_pad), jnp.float32)
    w3 = w3.at[:HIDDEN, :n_actions].set(p["aw3"])
    w3 = w3.at[HIDDEN:, n_actions].set(p["cw3"][:, 0])
    w3 = w3.astype(compute_dtype)                                              # (128,128)
    b3 = jnp.zeros((1, out_pad), jnp.float32)
    b3 = b3.at[0, :n_actions].set(p["ab3"][0])
    b3 = b3.at[0, n_actions].set(p["cb3"][0, 0])
    return dict(w1=w1, b1=b1, w2=w2, b2=b2, w3=w3, b3=b3)


def customnet_forward(x, packed, n_actions, *, tile_b=4096):
    """x: (B, S) float32. Returns (actor_probs (B, A) f32, critic_value (B, 1) f32)."""
    B, S = x.shape
    out_w = _round_up(n_actions + 1, 8)     # narrow lane count actually written to HBM

    # Tile selection: big tiles amortize the ~0.35us/step overhead; cap so (a) the
    # tile never exceeds the sublane-rounded batch and (b) large batches give
    # grid >= 2 so ("parallel",) can shard across the 2 TensorCores on v7x.
    if B < 8:
        tile_b = B                          # block == full dims (allowed)
    else:
        tile_b = min(tile_b, _round_up(B, 8),
                     max(256, _round_up(pl.cdiv(B, 2), 8)))
    grid = (pl.cdiv(B, tile_b),)            # ragged last block handles any B (no pad)

    def pinned(arr):                        # grid-invariant: stays VMEM-resident
        nd = arr.ndim
        return pl.BlockSpec(arr.shape, lambda i: (0,) * nd)

    # Lane-padded per-step VMEM footprint: x / out / f32 intermediates are each
    # ~tile_b * 512 B; 48 MiB covers tile_b up to ~8192 with double buffering and
    # stays under v7x's 64 MiB physical VMEM (v5e/v6e have 128 MiB).
    vmem_limit = 48 * 1024 * 1024

    out = pl.pallas_call(
        functools.partial(customnet_kernel, n_actions=n_actions),
        out_shape=jax.ShapeDtypeStruct((B, out_w), jnp.float32),
        grid=grid,
        in_specs=[
            pl.BlockSpec((tile_b, S), lambda i: (i, 0)),
            pinned(packed["w1"]), pinned(packed["b1"]),
            pinned(packed["w2"]), pinned(packed["b2"]),
            pinned(packed["w3"]), pinned(packed["b3"]),
        ],
        out_specs=pl.BlockSpec((tile_b, out_w), lambda i: (i, 0)),
        compiler_params=pltpu.CompilerParams(
            dimension_semantics=("parallel",),      # megacore sharding on v7x
            vmem_limit_bytes=vmem_limit),
    )(x, packed["w1"], packed["b1"], packed["w2"], packed["b2"],
      packed["w3"], packed["b3"])

    return out[:, :n_actions], out[:, n_actions:n_actions + 1]


# ----------------------------- reference & init -----------------------------

def _init_linear(key, fan_in, fan_out):
    # PyTorch nn.Linear default init: U(-1/sqrt(fan_in), 1/sqrt(fan_in))
    kw, kb = jax.random.split(key)
    bound = 1.0 / jnp.sqrt(float(fan_in))
    w = jax.random.uniform(kw, (fan_in, fan_out), jnp.float32, -bound, bound)
    b = jax.random.uniform(kb, (1, fan_out), jnp.float32, -bound, bound)
    return w, b


def init_params(key, state_dim, n_actions, hidden=HIDDEN):
    keys = jax.random.split(key, 6)
    aw1, ab1 = _init_linear(keys[0], state_dim, hidden)
    aw2, ab2 = _init_linear(keys[1], hidden, hidden)
    aw3, ab3 = _init_linear(keys[2], hidden, n_actions)
    cw1, cb1 = _init_linear(keys[3], state_dim, hidden)
    cw2, cb2 = _init_linear(keys[4], hidden, hidden)
    cw3, cb3 = _init_linear(keys[5], hidden, 1)
    return dict(aw1=aw1, ab1=ab1, aw2=aw2, ab2=ab2, aw3=aw3, ab3=ab3,
                cw1=cw1, cb1=cb1, cw2=cw2, cb2=cb2, cw3=cw3, cb3=cb3)


def _reference(x, p):
    h = jnp.maximum(x @ p["aw1"] + p["ab1"], 0.0)
    h = jnp.maximum(h @ p["aw2"] + p["ab2"], 0.0)
    logits = h @ p["aw3"] + p["ab3"]
    probs = jax.nn.softmax(logits, axis=-1)
    g = jnp.maximum(x @ p["cw1"] + p["cb1"], 0.0)
    g = jnp.maximum(g @ p["cw2"] + p["cb2"], 0.0)
    value = g @ p["cw3"] + p["cb3"]
    return probs, value


if __name__ == "__main__":
    B, S, A = 8, 4, 2   # batch, state dim (CartPole-like obs), num actions
    key = jax.random.PRNGKey(0)
    kx, kp, kx2 = jax.random.split(key, 3)
    x = jax.random.normal(kx, (B, S), jnp.float32)
    params = init_params(kp, S, A)
    ref_probs, ref_val = _reference(x, params)

    # f32 path: matches the reference to tight tolerance.
    packed_f32 = pack_params(params, n_actions=A, compute_dtype=jnp.float32)
    probs, val = jax.block_until_ready(customnet_forward(x, packed_f32, A))
    assert probs.shape == (B, A) and val.shape == (B, 1)
    assert jnp.allclose(probs, ref_probs, atol=1e-5, rtol=1e-5)
    assert jnp.allclose(val, ref_val, atol=1e-5, rtol=1e-5)
    assert jnp.allclose(jnp.sum(probs, axis=-1), 1.0, atol=1e-5)

    # Larger, non-tile-aligned batch exercises the multi-step grid + ragged last block.
    B2 = 1000
    x2 = jax.random.normal(kx2, (B2, S), jnp.float32)
    ref_probs2, ref_val2 = _reference(x2, params)
    probs2, val2 = jax.block_until_ready(
        customnet_forward(x2, packed_f32, A, tile_b=256))
    assert probs2.shape == (B2, A) and val2.shape == (B2, 1)
    assert jnp.allclose(probs2, ref_probs2, atol=1e-5, rtol=1e-5)
    assert jnp.allclose(val2, ref_val2, atol=1e-5, rtol=1e-5)

    # bf16 default path (all TPU generations): f32 accumulation + f32 softmax.
    packed_bf16 = pack_params(params, n_actions=A)   # default compute_dtype = bf16
    probs_b, val_b = jax.block_until_ready(customnet_forward(x, packed_bf16, A))
    assert jnp.allclose(probs_b, ref_probs, atol=5e-2, rtol=5e-2)
    assert jnp.allclose(val_b, ref_val, atol=5e-2, rtol=5e-2)
    assert jnp.allclose(jnp.sum(probs_b, axis=-1), 1.0, atol=1e-3)

    print("KERNEL_OK")
</pallas_src>

<mosaic_0001>
module attributes {stable_mosaic.version = 11 : i64} {
  func.func @customnet_kernel(%arg0: i32, %arg1: memref<8x4xf32, #tpu.memory_space<vmem>>, %arg2: memref<4x128xf32, #tpu.memory_space<vmem>>, %arg3: memref<1x128xf32, #tpu.memory_space<vmem>>, %arg4: memref<128x128xf32, #tpu.memory_space<vmem>>, %arg5: memref<1x128xf32, #tpu.memory_space<vmem>>, %arg6: memref<128x128xf32, #tpu.memory_space<vmem>>, %arg7: memref<1x128xf32, #tpu.memory_space<vmem>>, %arg8: memref<8x8xf32, #tpu.memory_space<vmem>>) attributes {dimension_semantics = [#tpu.dimension_semantics<parallel>], iteration_bounds = array<i64: 1>, scalar_prefetch = 0 : i64, scratch_operands = 0 : i64, tpu.core_type = #tpu.core_type<tc>, window_params = [{transform_indices = @transform_0, window_bounds = array<i64: 8, 4>}, {pipeline_mode = #tpu.pipeline_mode<synchronous>, transform_indices = @transform_1, window_bounds = array<i64: 4, 128>}, {pipeline_mode = #tpu.pipeline_mode<synchronous>, transform_indices = @transform_2, window_bounds = array<i64: 1, 128>}, {pipeline_mode = #tpu.pipeline_mode<synchronous>, transform_indices = @transform_3, window_bounds = array<i64: 128, 128>}, {pipeline_mode = #tpu.pipeline_mode<synchronous>, transform_indices = @transform_4, window_bounds = array<i64: 1, 128>}, {pipeline_mode = #tpu.pipeline_mode<synchronous>, transform_indices = @transform_5, window_bounds = array<i64: 128, 128>}, {pipeline_mode = #tpu.pipeline_mode<synchronous>, transform_indices = @transform_6, window_bounds = array<i64: 1, 128>}, {transform_indices = @transform_7, window_bounds = array<i64: 8, 8>}]} {
    %c0 = arith.constant 0 : index
    %c0_0 = arith.constant 0 : index
    %0 = vector.load %arg1[%c0, %c0_0] : memref<8x4xf32, #tpu.memory_space<vmem>>, vector<8x4xf32>
    %c0_1 = arith.constant 0 : index
    %c0_2 = arith.constant 0 : index
    %1 = vector.load %arg2[%c0_1, %c0_2] : memref<4x128xf32, #tpu.memory_space<vmem>>, vector<4x128xf32>
    %cst = arith.constant dense<0.000000e+00> : vector<8x128xf32>
    %2 = tpu.matmul %0, %1, %cst {dimension_numbers = #tpu.dot_dimension_numbers<[1], [0], [0], [1], [0, 0, 1, 1], [], []>} : vector<8x4xf32>, vector<4x128xf32>, vector<8x128xf32> -> vector<8x128xf32>
    %c0_3 = arith.constant 0 : index
    %c0_4 = arith.constant 0 : index
    %3 = vector.load %arg3[%c0_3, %c0_4] : memref<1x128xf32, #tpu.memory_space<vmem>>, vector<1x128xf32>
    %4 = vector.broadcast %3 : vector<1x128xf32> to vector<8x128xf32>
    %5 = arith.addf %2, %4 : vector<8x128xf32>
    %cst_5 = arith.constant 0.000000e+00 : f32
    %6 = vector.broadcast %cst_5 : f32 to vector<8x128xf32>
    %7 = arith.maximumf %5, %6 : vector<8x128xf32>
    %c0_6 = arith.constant 0 : index
    %c0_7 = arith.constant 0 : index
    %8 = vector.load %arg4[%c0_6, %c0_7] : memref<128x128xf32, #tpu.memory_space<vmem>>, vector<128x128xf32>
    %cst_8 = arith.constant dense<0.000000e+00> : vector<8x128xf32>
    %9 = tpu.matmul %7, %8, %cst_8 {dimension_numbers = #tpu.dot_dimension_numbers<[1], [0], [0], [1], [0, 0, 1, 1], [], []>} : vector<8x128xf32>, vector<128x128xf32>, vector<8x128xf32> -> vector<8x128xf32>
    %c0_9 = arith.constant 0 : index
    %c0_10 = arith.constant 0 : index
    %10 = vector.load %arg5[%c0_9, %c0_10] : memref<1x128xf32, #tpu.memory_space<vmem>>, vector<1x128xf32>
    %11 = vector.broadcast %10 : vector<1x128xf32> to vector<8x128xf32>
    %12 = arith.addf %9, %11 : vector<8x128xf32>
    %cst_11 = arith.constant 0.000000e+00 : f32
    %13 = vector.broadcast %cst_11 : f32 to vector<8x128xf32>
    %14 = arith.maximumf %12, %13 : vector<8x128xf32>
    %c0_12 = arith.constant 0 : index
    %c0_13 = arith.constant 0 : index
    %15 = vector.load %arg6[%c0_12, %c0_13] : memref<128x128xf32, #tpu.memory_space<vmem>>, vector<128x128xf32>
    %cst_14 = arith.constant dense<0.000000e+00> : vector<8x128xf32>
    %16 = tpu.matmul %14, %15, %cst_14 {dimension_numbers = #tpu.dot_dimension_numbers<[1], [0], [0], [1], [0, 0, 1, 1], [], []>} : vector<8x128xf32>, vector<128x128xf32>, vector<8x128xf32> -> vector<8x128xf32>
    %c0_15 = arith.constant 0 : index
    %c0_16 = arith.constant 0 : index
    %17 = vector.load %arg7[%c0_15, %c0_16] : memref<1x128xf32, #tpu.memory_space<vmem>>, vector<1x128xf32>
    %18 = vector.broadcast %17 : vector<1x128xf32> to vector<8x128xf32>
    %19 = arith.addf %16, %18 : vector<8x128xf32>
    %20 = tpu.iota {dimensions = array<i32: 1>} : vector<1x128xi32>
    %c2_i32 = arith.constant 2 : i32
    %21 = vector.broadcast %c2_i32 : i32 to vector<1x128xi32>
    %22 = arith.cmpi slt, %20, %21 : vector<1x128xi32>
    %cst_17 = arith.constant 0xFF800000 : f32
    %23 = vector.shape_cast %22 : vector<1x128xi1> to vector<1x128xi1>
    %24 = vector.broadcast %23 : vector<1x128xi1> to vector<8x128xi1>
    %25 = vector.broadcast %cst_17 : f32 to vector<8x128xf32>
    %26 = arith.select %24, %19, %25 : vector<8x128xi1>, vector<8x128xf32>
    %cst_18 = arith.constant dense<0xFF800000> : vector<8xf32>
    %27 = vector.multi_reduction <maximumf>, %26, %cst_18 [1] : vector<8x128xf32> to vector<8xf32>
    %28 = vector.shape_cast %27 : vector<8xf32> to vector<8x1xf32>
    %29 = vector.broadcast %28 : vector<8x1xf32> to vector<8x128xf32>
    %30 = arith.subf %26, %29 : vector<8x128xf32>
    %31 = math.exp %30 : vector<8x128xf32>
    %cst_19 = arith.constant 0.000000e+00 : f32
    %32 = vector.shape_cast %22 : vector<1x128xi1> to vector<1x128xi1>
    %33 = vector.broadcast %32 : vector<1x128xi1> to vector<8x128xi1>
    %34 = vector.broadcast %cst_19 : f32 to vector<8x128xf32>
    %35 = arith.select %33, %31, %34 : vector<8x128xi1>, vector<8x128xf32>
    %cst_20 = arith.constant dense<0.000000e+00> : vector<8xf32>
    %36 = vector.multi_reduction <add>, %35, %cst_20 [1] : vector<8x128xf32> to vector<8xf32>
    %37 = vector.shape_cast %36 : vector<8xf32> to vector<8x1xf32>
    %38 = tpu.reciprocal %37 : vector<8x1xf32> -> vector<8x1xf32>
    %39 = vector.broadcast %38 : vector<8x1xf32> to vector<8x128xf32>
    %40 = arith.mulf %35, %39 : vector<8x128xf32>
    %c2_i32_21 = arith.constant 2 : i32
    %41 = vector.broadcast %c2_i32_21 : i32 to vector<1x128xi32>
    %42 = arith.cmpi eq, %20, %41 : vector<1x128xi32>
    %cst_22 = arith.constant 0.000000e+00 : f32
    %43 = vector.shape_cast %42 : vector<1x128xi1> to vector<1x128xi1>
    %44 = vector.broadcast %43 : vector<1x128xi1> to vector<8x128xi1>
    %45 = vector.broadcast %cst_22 : f32 to vector<8x128xf32>
    %46 = arith.select %44, %19, %45 : vector<8x128xi1>, vector<8x128xf32>
    %47 = vector.shape_cast %22 : vector<1x128xi1> to vector<1x128xi1>
    %48 = vector.broadcast %47 : vector<1x128xi1> to vector<8x128xi1>
    %49 = arith.select %48, %40, %46 : vector<8x128xi1>, vector<8x128xf32>
    %50 = vector.extract_strided_slice %49 {offsets = [0, 0], sizes = [8, 8], strides = [1, 1]} : vector<8x128xf32> to vector<8x8xf32>
    %c0_23 = arith.constant 0 : index
    %c0_24 = arith.constant 0 : index
    %51 = vector.load %arg8[%c0_23, %c0_24] : memref<8x8xf32, #tpu.memory_space<vmem>>, vector<8x8xf32>
    tpu.vector_store %arg8[%c0_23, %c0_24], %50 {strides = array<i32>} : memref<8x8xf32, #tpu.memory_space<vmem>>, vector<8x8xf32>,
    return
  }
  func.func @transform_0(%arg0: i32) -> (i32, i32) {
    %c0_i32 = arith.constant 0 : i32
    %c0_i32_0 = arith.constant 0 : i32
    return %arg0, %c0_i32 : i32, i32
  }
  func.func @transform_1(%arg0: i32) -> (i32, i32) {
    %c0_i32 = arith.constant 0 : i32
    %c0_i32_0 = arith.constant 0 : i32
    %c0_i32_1 = arith.constant 0 : i32
    return %c0_i32, %c0_i32_0 : i32, i32
  }
  func.func @transform_2(%arg0: i32) -> (i32, i32) {
    %c0_i32 = arith.constant 0 : i32
    %c0_i32_0 = arith.constant 0 : i32
    %c0_i32_1 = arith.constant 0 : i32
    return %c0_i32, %c0_i32_0 : i32, i32
  }
  func.func @transform_3(%arg0: i32) -> (i32, i32) {
    %c0_i32 = arith.constant 0 : i32
    %c0_i32_0 = arith.constant 0 : i32
    %c0_i32_1 = arith.constant 0 : i32
    return %c0_i32, %c0_i32_0 : i32, i32
  }
  func.func @transform_4(%arg0: i32) -> (i32, i32) {
    %c0_i32 = arith.constant 0 : i32
    %c0_i32_0 = arith.constant 0 : i32
    %c0_i32_1 = arith.constant 0 : i32
    return %c0_i32, %c0_i32_0 : i32, i32
  }
  func.func @transform_5(%arg0: i32) -> (i32, i32) {
    %c0_i32 = arith.constant 0 : i32
    %c0_i32_0 = arith.constant 0 : i32
    %c0_i32_1 = arith.constant 0 : i32
    return %c0_i32, %c0_i32_0 : i32, i32
  }
  func.func @transform_6(%arg0: i32) -> (i32, i32) {
    %c0_i32 = arith.constant 0 : i32
    %c0_i32_0 = arith.constant 0 : i32
    %c0_i32_1 = arith.constant 0 : i32
    return %c0_i32, %c0_i32_0 : i32, i32
  }
  func.func @transform_7(%arg0: i32) -> (i32, i32) {
    %c0_i32 = arith.constant 0 : i32
    %c0_i32_0 = arith.constant 0 : i32
    return %arg0, %c0_i32 : i32, i32
  }
}

</mosaic_0001>

<llo_original>
// kernel: tpu_custom_call.1
$region0: #{tpu_custom_call.1}
  #allocation0 [shape = 'u32[]', space=smem, size = 0x4, offset = 0x4, fixed_abs, tag = 'smem constant byte address 0x4 - core index']
  #allocation1 [shape = 'u32[144,128]{1,0:T(1,128)}', space=vmem, size = 0x12000, scoped, tag = 'internal scratch']
  %s0 = inlined_call_operand.vmem [shape: f32[8,4], index: 0, kind: input, shape index: {}]
  %s1 = inlined_call_operand.vmem [shape: f32[4,128], index: 1, kind: input, shape index: {}]
  %s2 = inlined_call_operand.vmem [shape: f32[1,128], index: 2, kind: input, shape index: {}]
  %s3 = inlined_call_operand.hbm [shape: f32[128,128], index: 3, kind: input, shape index: {}]
  %s4 = inlined_call_operand.vmem [shape: f32[1,128], index: 4, kind: input, shape index: {}]
  %s5 = inlined_call_operand.hbm [shape: f32[128,128], index: 5, kind: input, shape index: {}]
  %s6 = inlined_call_operand.vmem [shape: f32[1,128], index: 6, kind: input, shape index: {}]
  %s7 = inlined_call_operand.hbm [shape: f32[8,8], index: 7, kind: output, shape index: {}]
  %s8 = sld [smem:[#allocation0]]
  $region46: #{tpu_custom_call.1} parent=0
    _
  %s10 = ssub.s32 1, %s8
  %s11 = scalar_select 0, %s10, %s8
  $region1: #{tpu_custom_call.1} parent=0
    #allocation2 [shape = 'u8[65536]{0}', space=vmem, size = 0x10000, scoped, tag = 'input window, operand 3, single buffered']
    #allocation3 [shape = 's32[1]{0}', space=sflag, size = 0x4, scoped, tag = 'scoped memory for tpu_custom_call.1']
    #allocation4 [shape = 's32[1]{0}', space=sflag, size = 0x4, scoped, tag = 'scoped memory for tpu_custom_call.1']
    #allocation5 [shape = 'u8[65536]{0}', space=vmem, size = 0x10000, scoped, tag = 'input window, operand 5, single buffered']
    #allocation6 [shape = 's32[1]{0}', space=sflag, size = 0x4, scoped, tag = 'scoped memory for tpu_custom_call.1']
    #allocation7 [shape = 'u8[4096]{0}', space=vmem, size = 0x1000, scoped, tag = 'output window, operand 0, single buffered']
    %12 = vsyncpa [#allocation3], 0
    %13 = vsyncpa [#allocation6], 0
    %14 = vsyncpa [#allocation4], 0
    // Predicated region
    $region2: #{tpu_custom_call.1} parent=1 // pred_check
      _
    $region3: #{tpu_custom_call.1} parent=1 // pred_check_branch
      %16 = sbr.rel (0) target = $region5
    $region4: #{tpu_custom_call.1} parent=1 // pred_region
      _
    $region5: #{tpu_custom_call.1} parent=1 // pred_fallthru
      _
    // Predicated region
    $region6: #{tpu_custom_call.1} parent=1 // pred_check
      _
    $region7: #{tpu_custom_call.1} parent=1 // pred_check_branch
      %18 = sbr.rel (0) target = $region9
    $region8: #{tpu_custom_call.1} parent=1 // pred_region
      _
    $region9: #{tpu_custom_call.1} parent=1 // pred_fallthru
      _
    // Predicated region
    $region10: #{tpu_custom_call.1} parent=1 // pred_check
      _
    $region11: #{tpu_custom_call.1} parent=1 // pred_check_branch
      %20 = sbr.rel (0) target = $region13
    $region12: #{tpu_custom_call.1} parent=1 // pred_region
      _
    $region13: #{tpu_custom_call.1} parent=1 // pred_fallthru
      _
    // Predicated region
    $region14: #{tpu_custom_call.1} parent=1 // pred_check
      _
    $region15: #{tpu_custom_call.1} parent=1 // pred_check_branch
      %22 = sbr.rel (0) target = $region17
    $region16: #{tpu_custom_call.1} parent=1 // pred_region
      %s24 = ssub.s32 2048, 2048
      %25 = vsyncadd [#allocation3], %s24
      %s26 = sshll.u32 [#allocation2], 4
      %s27 = int_to_ptr.vmem [resolvable:$true] %s26
      %32 = dma.hbm_to_vmem [thread:$0]  %s3, 2048, %s27, [#allocation3], 128, 128, 8
    $region17: #{tpu_custom_call.1} parent=1 // pred_fallthru
      _
    // Predicated region
    $region18: #{tpu_custom_call.1} parent=1 // pred_check
      _
    $region19: #{tpu_custom_call.1} parent=1 // pred_check_branch
      %34 = sbr.rel (0) target = $region21
    $region20: #{tpu_custom_call.1} parent=1 // pred_region
      _
    $region21: #{tpu_custom_call.1} parent=1 // pred_fallthru
      _
    // Predicated region
    $region22: #{tpu_custom_call.1} parent=1 // pred_check
      _
    $region23: #{tpu_custom_call.1} parent=1 // pred_check_branch
      %36 = sbr.rel (0) target = $region25
    $region24: #{tpu_custom_call.1} parent=1 // pred_region
      %s38 = ssub.s32 2048, 2048
      %39 = vsyncadd [#allocation6], %s38
      %s40 = sshll.u32 [#allocation5], 4
      %s41 = int_to_ptr.vmem [resolvable:$true] %s40
      %46 = dma.hbm_to_vmem [thread:$0]  %s5, 2048, %s41, [#allocation6], 128, 128, 8
    $region25: #{tpu_custom_call.1} parent=1 // pred_fallthru
      _
    // Predicated region
    $region26: #{tpu_custom_call.1} parent=1 // pred_check
      _
    $region27: #{tpu_custom_call.1} parent=1 // pred_check_branch
      %48 = sbr.rel (0) target = $region29
    $region28: #{tpu_custom_call.1} parent=1 // pred_region
      _
    $region29: #{tpu_custom_call.1} parent=1 // pred_fallthru
      _
    // Predicated region
    $region30: #{tpu_custom_call.1} parent=1 // pred_check
      _
    $region31: #{tpu_custom_call.1} parent=1 // pred_check_branch
      %50 = sbr.rel (0) target = $region33
    $region32: #{tpu_custom_call.1} parent=1 // pred_region
      %51 = dma.done [#allocation3], 2048
    $region33: #{tpu_custom_call.1} parent=1 // pred_fallthru
      _
    // Predicated region
    $region34: #{tpu_custom_call.1} parent=1 // pred_check
      _
    $region35: #{tpu_custom_call.1} parent=1 // pred_check_branch
      %53 = sbr.rel (0) target = $region37
    $region36: #{tpu_custom_call.1} parent=1 // pred_region
      %54 = dma.done [#allocation6], 2048
    $region37: #{tpu_custom_call.1} parent=1 // pred_fallthru
      _
    %v55 = vld [vmem:[%s0] sm:$0xff]
    %v56 = vld [vmem:[%s1] sm:$0xf]
    %v57 = vld [vmem:[%s2] sm:$0x1]
    %v59 = vlaneseq
    %v60 = vshrl.u32 %v59, 7
    %v61 = vsub.s32 0, %v60
    %v62 = vrot.slane %v57, %v61
    %vm64 = vcmask 31744
    %v66 = vsel %vm64, %v55, 0
    %vm68 = vcmask 1043456
    %v70 = vsel %vm68, %v56, 0
    %72 = vmatprep.subr.mxu0 0.0
    %73 = vmatpush1.msra.mxu0 %v70
    %74 = vmatprep.subr.mxu0 0.0
    %75 = vmatpush1.msra.mxu0 0.0
    %76 = vmatprep.subr.mxu0 0.0
    %77 = vmatpush1.msra.mxu0 0.0
    %78 = vmatprep.subr.mxu0 0.0
    %79 = vmatpush1.msra.mxu0 0.0
    %80 = vmatprep.subr.mxu0 0.0
    %81 = vmatpush1.msra.mxu0 0.0
    %82 = vmatprep.subr.mxu0 0.0
    %83 = vmatpush1.msra.mxu0 0.0
    %84 = vmatprep.subr.mxu0 0.0
    %85 = vmatpush1.msra.mxu0 0.0
    %86 = vmatprep.subr.mxu0 0.0
    %87 = vmatpush1.msra.mxu0 0.0
    %88 = vmatprep.subr.mxu0 0.0
    %89 = vmatpush1.msra.mxu0 0.0
    %90 = vmatprep.subr.mxu0 0.0
    %91 = vmatpush1.msra.mxu0 0.0
    %92 = vmatprep.subr.mxu0 0.0
    %93 = vmatpush1.msra.mxu0 0.0
    %94 = vmatprep.subr.mxu0 0.0
    %95 = vmatpush1.msra.mxu0 0.0
    %96 = vmatprep.subr.mxu0 0.0
    %97 = vmatpush1.msra.mxu0 0.0
    %98 = vmatprep.subr.mxu0 0.0
    %99 = vmatpush1.msra.mxu0 0.0
    %100 = vmatprep.subr.mxu0 0.0
    %101 = vmatpush1.msra.mxu0 0.0
    %102 = vmatprep.subr.mxu0 0.0
    %103 = vmatpush1.msra.mxu0 0.0
    %104 = vmatprep.subr.mxu0 0.0
    %105 = vmatpush1.msra.mxu0 0.0
    %106 = vmatprep.subr.mxu0 0.0
    %107 = vmatpush1.msra.mxu0 0.0
    %108 = vmatprep.subr.mxu0 0.0
    %109 = vmatpush1.msra.mxu0 0.0
    %110 = vmatprep.subr.mxu0 0.0
    %111 = vmatpush1.msra.mxu0 0.0
    %112 = vmatprep.subr.mxu0 0.0
    %113 = vmatpush1.msra.mxu0 0.0
    %114 = vmatprep.subr.mxu0 0.0
    %115 = vmatpush1.msra.mxu0 0.0
    %116 = vmatprep.subr.mxu0 0.0
    %117 = vmatpush1.msra.mxu0 0.0
    %118 = vmatprep.subr.mxu0 0.0
    %119 = vmatpush1.msra.mxu0 0.0
    %120 = vmatprep.subr.mxu0 0.0
    %121 = vmatpush1.msra.mxu0 0.0
    %122 = vmatprep.subr.mxu0 0.0
    %123 = vmatpush1.msra.mxu0 0.0
    %124 = vmatprep.subr.mxu0 0.0
    %125 = vmatpush1.msra.mxu0 0.0
    %126 = vmatprep.subr.mxu0 0.0
    %127 = vmatpush1.msra.mxu0 0.0
    %128 = vmatprep.subr.mxu0 0.0
    %129 = vmatpush1.msra.mxu0 0.0
    %130 = vmatprep.subr.mxu0 0.0
    %131 = vmatpush1.msra.mxu0 0.0
    %132 = vmatprep.subr.mxu0 0.0
    %133 = vmatpush1.msra.mxu0 0.0
    %134 = vmatprep.subr.mxu0 0.0
    %135 = vmatpush1.msra.mxu0 0.0
    %136 = vmatprep.mubr.f32.mxu0 0.0
    %137 = vmatmul.mubr.f32.gmra.mrb[0].mxu0 %v66
    %v138 = vpop.f32.mrb[0].mxu0
    %v139 = vadd.f32 %v62, %v138
    %v140 = vpop.f32.mrb[0].mxu0
    %141 = vdwg.mxu0
    %v142 = vmax.f32 %v139, 0.0
    %v143 = vld [vmem:[#allocation2] sm:$0xff]
    %v144 = vld [vmem:[#allocation2 + $0x8] sm:$0xff]
    %v145 = vld [vmem:[#allocation2 + $0x10] sm:$0xff]
    %v146 = vld [vmem:[#allocation2 + $0x18] sm:$0xff]
    %v147 = vld [vmem:[#allocation2 + $0x20] sm:$0xff]
    %v148 = vld [vmem:[#allocation2 + $0x28] sm:$0xff]
    %v149 = vld [vmem:[#allocation2 + $0x30] sm:$0xff]
    %v150 = vld [vmem:[#allocation2 + $0x38] sm:$0xff]
    %v151 = vld [vmem:[#allocation2 + $0x40] sm:$0xff]
    %v152 = vld [vmem:[#allocation2 + $0x48] sm:$0xff]
    %v153 = vld [vmem:[#allocation2 + $0x50] sm:$0xff]
    %v154 = vld [vmem:[#allocation2 + $0x58] sm:$0xff]
    %v155 = vld [vmem:[#allocation2 + $0x60] sm:$0xff]
    %v156 = vld [vmem:[#allocation2 + $0x68] sm:$0xff]
    %v157 = vld [vmem:[#allocation2 + $0x70] sm:$0xff]
    %v158 = vld [vmem:[#allocation2 + $0x78] sm:$0xff]
    %v159 = vld [vmem:[%s4] sm:$0x1]
    %v161 = vlaneseq
    %v162 = vshrl.u32 %v161, 7
    %v163 = vsub.s32 0, %v162
    %v164 = vrot.slane %v159, %v163
    %166 = vmatprep.subr.mxu0 0.0
    %167 = vmatpush1.msra.mxu0 %v143
    %168 = vmatprep.subr.mxu0 0.0
    %169 = vmatpush1.msra.mxu0 %v144
    %170 = vmatprep.subr.mxu0 0.0
    %171 = vmatpush1.msra.mxu0 %v145
    %172 = vmatprep.subr.mxu0 0.0
    %173 = vmatpush1.msra.mxu0 %v146
    %174 = vmatprep.subr.mxu0 0.0
    %175 = vmatpush1.msra.mxu0 %v147
    %176 = vmatprep.subr.mxu0 0.0
    %177 = vmatpush1.msra.mxu0 %v148
    %178 = vmatprep.subr.mxu0 0.0
    %179 = vmatpush1.msra.mxu0 %v149
    %180 = vmatprep.subr.mxu0 0.0
    %181 = vmatpush1.msra.mxu0 %v150
    %182 = vmatprep.subr.mxu0 0.0
    %183 = vmatpush1.msra.mxu0 %v151
    %184 = vmatprep.subr.mxu0 0.0
    %185 = vmatpush1.msra.mxu0 %v152
    %186 = vmatprep.subr.mxu0 0.0
    %187 = vmatpush1.msra.mxu0 %v153
    %188 = vmatprep.subr.mxu0 0.0
    %189 = vmatpush1.msra.mxu0 %v154
    %190 = vmatprep.subr.mxu0 0.0
    %191 = vmatpush1.msra.mxu0 %v155
    %192 = vmatprep.subr.mxu0 0.0
    %193 = vmatpush1.msra.mxu0 %v156
    %194 = vmatprep.subr.mxu0 0.0
    %195 = vmatpush1.msra.mxu0 %v157
    %196 = vmatprep.subr.mxu0 0.0
    %197 = vmatpush1.msra.mxu0 %v158
    %198 = vmatprep.subr.mxu0 0.0
    %199 = vmatpush1.msra.mxu0 0.0
    %200 = vmatprep.subr.mxu0 0.0
    %201 = vmatpush1.msra.mxu0 0.0
    %202 = vmatprep.subr.mxu0 0.0
    %203 = vmatpush1.msra.mxu0 0.0
    %204 = vmatprep.subr.mxu0 0.0
    %205 = vmatpush1.msra.mxu0 0.0
    %206 = vmatprep.subr.mxu0 0.0
    %207 = vmatpush1.msra.mxu0 0.0
    %208 = vmatprep.subr.mxu0 0.0
    %209 = vmatpush1.msra.mxu0 0.0
    %210 = vmatprep.subr.mxu0 0.0
    %211 = vmatpush1.msra.mxu0 0.0
    %212 = vmatprep.subr.mxu0 0.0
    %213 = vmatpush1.msra.mxu0 0.0
    %214 = vmatprep.subr.mxu0 0.0
    %215 = vmatpush1.msra.mxu0 0.0
    %216 = vmatprep.subr.mxu0 0.0
    %217 = vmatpush1.msra.mxu0 0.0
    %218 = vmatprep.subr.mxu0 0.0
    %219 = vmatpush1.msra.mxu0 0.0
    %220 = vmatprep.subr.mxu0 0.0
    %221 = vmatpush1.msra.mxu0 0.0
    %222 = vmatprep.subr.mxu0 0.0
    %223 = vmatpush1.msra.mxu0 0.0
    %224 = vmatprep.subr.mxu0 0.0
    %225 = vmatpush1.msra.mxu0 0.0
    %226 = vmatprep.subr.mxu0 0.0
    %227 = vmatpush1.msra.mxu0 0.0
    %228 = vmatprep.subr.mxu0 0.0
    %229 = vmatpush1.msra.mxu0 0.0
    %230 = vmatprep.mubr.f32.mxu0 0.0
    %231 = vmatmul.mubr.f32.gmra.mrb[0].mxu0 %v142
    %v232 = vpop.f32.mrb[0].mxu0
    %v233 = vadd.f32 %v164, %v232
    %v234 = vpop.f32.mrb[0].mxu0
    %235 = vdwg.mxu0
    %v236 = vmax.f32 %v233, 0.0
    %v237 = vld [vmem:[#allocation5] sm:$0xff]
    %v238 = vld [vmem:[#allocation5 + $0x8] sm:$0xff]
    %v239 = vld [vmem:[#allocation5 + $0x10] sm:$0xff]
    %v240 = vld [vmem:[#allocation5 + $0x18] sm:$0xff]
    %v241 = vld [vmem:[#allocation5 + $0x20] sm:$0xff]
    %v242 = vld [vmem:[#allocation5 + $0x28] sm:$0xff]
    %v243 = vld [vmem:[#allocation5 + $0x30] sm:$0xff]
    %v244 = vld [vmem:[#allocation5 + $0x38] sm:$0xff]
    %v245 = vld [vmem:[#allocation5 + $0x40] sm:$0xff]
    %v246 = vld [vmem:[#allocation5 + $0x48] sm:$0xff]
    %v247 = vld [vmem:[#allocation5 + $0x50] sm:$0xff]
    %v248 = vld [vmem:[#allocation5 + $0x58] sm:$0xff]
    %v249 = vld [vmem:[#allocation5 + $0x60] sm:$0xff]
    %v250 = vld [vmem:[#allocation5 + $0x68] sm:$0xff]
    %v251 = vld [vmem:[#allocation5 + $0x70] sm:$0xff]
    %v252 = vld [vmem:[#allocation5 + $0x78] sm:$0xff]
    %v253 = vld [vmem:[%s6] sm:$0x1]
    %v255 = vlaneseq
    %v256 = vshrl.u32 %v255, 7
    %v257 = vsub.s32 0, %v256
    %v258 = vrot.slane %v253, %v257
    %260 = vmatprep.subr.mxu0 0.0
    %261 = vmatpush1.msra.mxu0 %v237
    %262 = vmatprep.subr.mxu0 0.0
    %263 = vmatpush1.msra.mxu0 %v238
    %264 = vmatprep.subr.mxu0 0.0
    %265 = vmatpush1.msra.mxu0 %v239
    %266 = vmatprep.subr.mxu0 0.0
    %267 = vmatpush1.msra.mxu0 %v240
    %268 = vmatprep.subr.mxu0 0.0
    %269 = vmatpush1.msra.mxu0 %v241
    %270 = vmatprep.subr.mxu0 0.0
    %271 = vmatpush1.msra.mxu0 %v242
    %272 = vmatprep.subr.mxu0 0.0
    %273 = vmatpush1.msra.mxu0 %v243
    %274 = vmatprep.subr.mxu0 0.0
    %275 = vmatpush1.msra.mxu0 %v244
    %276 = vmatprep.subr.mxu0 0.0
    %277 = vmatpush1.msra.mxu0 %v245
    %278 = vmatprep.subr.mxu0 0.0
    %279 = vmatpush1.msra.mxu0 %v246
    %280 = vmatprep.subr.mxu0 0.0
    %281 = vmatpush1.msra.mxu0 %v247
    %282 = vmatprep.subr.mxu0 0.0
    %283 = vmatpush1.msra.mxu0 %v248
    %284 = vmatprep.subr.mxu0 0.0
    %285 = vmatpush1.msra.mxu0 %v249
    %286 = vmatprep.subr.mxu0 0.0
    %287 = vmatpush1.msra.mxu0 %v250
    %288 = vmatprep.subr.mxu0 0.0
    %289 = vmatpush1.msra.mxu0 %v251
    %290 = vmatprep.subr.mxu0 0.0
    %291 = vmatpush1.msra.mxu0 %v252
    %292 = vmatprep.subr.mxu0 0.0
    %293 = vmatpush1.msra.mxu0 0.0
    %294 = vmatprep.subr.mxu0 0.0
    %295 = vmatpush1.msra.mxu0 0.0
    %296 = vmatprep.subr.mxu0 0.0
    %297 = vmatpush1.msra.mxu0 0.0
    %298 = vmatprep.subr.mxu0 0.0
    %299 = vmatpush1.msra.mxu0 0.0
    %300 = vmatprep.subr.mxu0 0.0
    %301 = vmatpush1.msra.mxu0 0.0
    %302 = vmatprep.subr.mxu0 0.0
    %303 = vmatpush1.msra.mxu0 0.0
    %304 = vmatprep.subr.mxu0 0.0
    %305 = vmatpush1.msra.mxu0 0.0
    %306 = vmatprep.subr.mxu0 0.0
    %307 = vmatpush1.msra.mxu0 0.0
    %308 = vmatprep.subr.mxu0 0.0
    %309 = vmatpush1.msra.mxu0 0.0
    %310 = vmatprep.subr.mxu0 0.0
    %311 = vmatpush1.msra.mxu0 0.0
    %312 = vmatprep.subr.mxu0 0.0
    %313 = vmatpush1.msra.mxu0 0.0
    %314 = vmatprep.subr.mxu0 0.0
    %315 = vmatpush1.msra.mxu0 0.0
    %316 = vmatprep.subr.mxu0 0.0
    %317 = vmatpush1.msra.mxu0 0.0
    %318 = vmatprep.subr.mxu0 0.0
    %319 = vmatpush1.msra.mxu0 0.0
    %320 = vmatprep.subr.mxu0 0.0
    %321 = vmatpush1.msra.mxu0 0.0
    %322 = vmatprep.subr.mxu0 0.0
    %323 = vmatpush1.msra.mxu0 0.0
    %324 = vmatprep.mubr.f32.mxu0 0.0
    %325 = vmatmul.mubr.f32.gmra.mrb[0].mxu0 %v236
    %v326 = vpop.f32.mrb[0].mxu0
    %v327 = vadd.f32 %v258, %v326
    %v328 = vpop.f32.mrb[0].mxu0
    %329 = vdwg.mxu0
    %v330 = vlaneseq
    %v331 = vand.u32 %v330, 127
    %vm332 = vcmp.lt.s32.totalorder %v331, 2
    %v333 = vsel %vm332, 1, 0
    %vm334 = vcmp.eq.s32.totalorder %v333, 1
    %v335 = vsel %vm334, %v327, -inf
    %336 = vmax.xlane.f32.xlu0 %v335
    %v337 = vpop.xlane.xlu0 %336
    %v338 = vsub.f32 %v335, %v337
    %v339 = vmul.f32 %v338, 1.442695
    %v340 = vpow.pop %v339
    %v341 = vsel %vm334, %v340, 0.0
    %342 = vadd.xlane.f32.xlu0 %v341
    %v343 = vpop.xlane.xlu0 %342
    %v344 = vrcp.pop %v343
    %v345 = vmul.f32 %v341, %v344
    %vm346 = vcmp.eq.s32.totalorder %v331, 2
    %v347 = vsel %vm346, 1, 0
    %vm348 = vcmp.eq.s32.totalorder %v347, 1
    %v349 = vsel %vm348, %v327, 0.0
    %v350 = vsel %vm334, %v345, %v349
    %vm351 = vcmask 64512
    %352 = vst.msk [vmem:[#allocation7] sm:$0xff] %vm351, %v350
    // Predicated region
    $region38: #{tpu_custom_call.1} parent=1 // pred_check
      _
    $region39: #{tpu_custom_call.1} parent=1 // pred_check_branch
      %354 = sbr.rel (0) target = $region41
    $region40: #{tpu_custom_call.1} parent=1 // pred_region
      %s356 = ssub.s32 128, 128
      %357 = vsyncadd [#allocation4], %s356
      %s359 = sshll.u32 [#allocation7], 4
      %s360 = int_to_ptr.vmem [resolvable:$true] %s359
      %362 = dma.vmem_to_hbm [thread:$0]  %s360, 128, %s7, [#allocation4]
    $region41: #{tpu_custom_call.1} parent=1 // pred_fallthru
      _
    // Predicated region
    $region42: #{tpu_custom_call.1} parent=1 // pred_check
      _
    $region43: #{tpu_custom_call.1} parent=1 // pred_check_branch
      %364 = sbr.rel (0) target = $region45
    $region44: #{tpu_custom_call.1} parent=1 // pred_region
      %365 = dma.done [#allocation4], 128
    $region45: #{tpu_custom_call.1} parent=1 // pred_fallthru
      _
    %366 = vsyncpa [#allocation3], 1
    %367 = vsyncpa [#allocation6], 1
    %368 = vsyncpa [#allocation4], 1

</llo_original>
